<compile_context>
chip_gen: v5e
topology: v5e:2x2
jax: 0.10.0
libtpu: 0.0.40
codegen_flags: <defaults>
</compile_context>

<pallas_src>
import jax
import jax.numpy as jnp
from jax.experimental import pallas as pl
from jax.experimental.pallas import tpu as pltpu


# ---------------------------------------------------------------------------
# Feature name configuration (stands in for FEAT_NAMES in the original code).
# ---------------------------------------------------------------------------
FEAT_NAMES = {
    "sparse_feats": ["user_id", "item_id"],
    "multi_sparse_feats": ["tags"],
    "dense_feats": ["price"],
}


def _round_up(x: int, m: int) -> int:
    return (x + m - 1) // m * m


def _vmem_limit_bytes(resident_bytes: int):
    """Per-generation VMEM budget (v7x: 64 MiB physical; v5e/v6e: 128 MiB)."""
    try:
        cap = pltpu.get_tpu_info().vmem_capacity_bytes
    except Exception:
        cap = 64 << 20  # assume the smallest (v7x) if the query is unavailable
    want = resident_bytes * 2 + (8 << 20)
    return int(min(max(want, 32 << 20), cap * 3 // 4))


# ---------------------------------------------------------------------------
# Fused single-row kernel: all nn.Embedding gathers + nn.Linear(1->E) products
# for one batch tile per grid step.
# ---------------------------------------------------------------------------
def _make_fused_kernel(n_sparse, n_dense, emb_dim, b_tile):
    def kernel(idx_ref, *refs):
        # refs = [table_0 .. table_{S-1}, (dense_vals, dense_w)?, out]
        out_ref = refs[-1]                        # (b_tile, total_pad) VMEM
        base = pl.program_id(0) * b_tile

        # Zero the whole block once (covers lane padding; keeps writeback dense).
        out_ref[...] = jnp.zeros_like(out_ref)

        # Row gathers from the VMEM-resident tables.
        @pl.loop(0, b_tile)
        def _(b):
            for f in range(n_sparse):
                row = refs[f][idx_ref[f, base + b], :]            # (E,)
                out_ref[pl.ds(b, 1), pl.ds(f * emb_dim, emb_dim)] = row[None, :]

        # Dense features: one lane-dense VPU multiply + store per feature.
        if n_dense:
            vals = refs[n_sparse][...]            # (b_tile, D) VMEM
            w = refs[n_sparse + 1][...]           # (D, E)       VMEM
            for d in range(n_dense):
                off = (n_sparse + d) * emb_dim
                out_ref[:, pl.ds(off, emb_dim)] = vals[:, d:d + 1] * w[d:d + 1, :]

    return kernel


@jax.jit
def _fused_single_row(indices, tables, dense_vals, dense_weights):
    """indices: (S, B) int32; tables: tuple of S (V_s, E) f32 tables;
    dense_vals: (B, D) f32 or None; dense_weights: (D, E) f32 or None.
    Returns a (B, (S + D) * E) f32 slab (feature-major along the lane dim)."""
    n_sparse, batch = indices.shape
    emb_dim = tables[0].shape[1]
    n_dense = 0 if dense_vals is None else dense_vals.shape[1]
    total = (n_sparse + n_dense) * emb_dim
    total_pad = _round_up(max(total, 128), 128)   # lane-dense output slab

    b_tile = min(128, _round_up(batch, 8))
    b_pad = _round_up(batch, b_tile)

    indices = jnp.pad(indices, ((0, 0), (0, b_pad - batch)))      # pad with idx 0

    operands = list(tables)
    in_specs = [pl.BlockSpec(t.shape, lambda i, idx: (0, 0)) for t in tables]
    if n_dense:
        dense_vals = jnp.pad(dense_vals, ((0, b_pad - batch), (0, 0)))
        in_specs.append(pl.BlockSpec((b_tile, n_dense), lambda i, idx: (i, 0)))
        in_specs.append(pl.BlockSpec(memory_space=pltpu.MemorySpace.VMEM))
        operands += [dense_vals, dense_weights]

    resident = sum(int(t.size) * 4 for t in tables)
    limit = _vmem_limit_bytes(resident) if resident > (8 << 20) else None

    grid_spec = pltpu.PrefetchScalarGridSpec(
        num_scalar_prefetch=1,
        grid=(b_pad // b_tile,),
        in_specs=in_specs,
        out_specs=pl.BlockSpec((b_tile, total_pad), lambda i, idx: (i, 0)),
    )
    slab = pl.pallas_call(
        _make_fused_kernel(n_sparse, n_dense, emb_dim, b_tile),
        out_shape=jax.ShapeDtypeStruct((b_pad, total_pad), jnp.float32),
        grid_spec=grid_spec,
        compiler_params=pltpu.CompilerParams(
            dimension_semantics=("parallel",),      # shard batch tiles over 2 TCs
            vmem_limit_bytes=limit),
    )(indices, *operands)
    return slab[:batch, :total]


# ---------------------------------------------------------------------------
# EmbeddingBag (mean) kernel: one bag tile per grid step, table resident in
# VMEM, segment-sum done in-kernel, each bag's output written exactly once.
# ---------------------------------------------------------------------------
def _make_bag_kernel(bag_tile, emb_dim):
    def kernel(flats_ref, starts_ref, counts_ref, tbl_ref, out_ref):
        base = pl.program_id(0) * bag_tile
        out_ref[...] = jnp.zeros_like(out_ref)

        @pl.loop(0, bag_tile)
        def _(j):
            start = starts_ref[base + j]
            cnt = counts_ref[base + j]

            @pl.loop(0, cnt)
            def _(i):
                row = tbl_ref[flats_ref[start + i], :]            # (E,)
                out_ref[pl.ds(j, 1), :] += row[None, :]

            @pl.when(cnt > 0)
            def _():
                out_ref[pl.ds(j, 1), :] = (
                    out_ref[pl.ds(j, 1), :] / cnt.astype(jnp.float32))

    return kernel


@jax.jit
def _embedding_bag_mean(flats, offsets, table):
    """flats: (N,) int32 flattened indices, offsets: (B,) int32 bag starts,
    table: (V, E) f32.  Returns (B, E) mean-pooled embeddings (PyTorch default)."""
    n_idx = flats.shape[0]
    n_bags = offsets.shape[0]
    vocab, emb_dim = table.shape

    flats = jnp.clip(flats.astype(jnp.int32), 0, vocab - 1)
    offsets = offsets.astype(jnp.int32)
    ends = jnp.concatenate([offsets[1:], jnp.array([n_idx], jnp.int32)])
    counts = ends - offsets                                       # (B,)

    bag_tile = min(64, _round_up(n_bags, 8))
    bags_pad = _round_up(n_bags, bag_tile)
    starts = jnp.pad(offsets, (0, bags_pad - n_bags))             # pad start = 0
    counts_p = jnp.pad(counts, (0, bags_pad - n_bags))            # pad count = 0

    resident = int(table.size) * 4
    limit = _vmem_limit_bytes(resident) if resident > (8 << 20) else None

    grid_spec = pltpu.PrefetchScalarGridSpec(
        num_scalar_prefetch=3,
        grid=(bags_pad // bag_tile,),
        in_specs=[pl.BlockSpec((vocab, emb_dim), lambda t, f, s, c: (0, 0))],
        out_specs=pl.BlockSpec((bag_tile, emb_dim), lambda t, f, s, c: (t, 0)),
    )
    pooled = pl.pallas_call(
        _make_bag_kernel(bag_tile, emb_dim),
        out_shape=jax.ShapeDtypeStruct((bags_pad, emb_dim), jnp.float32),
        grid_spec=grid_spec,
        compiler_params=pltpu.CompilerParams(
            dimension_semantics=("parallel",),      # independent bag tiles
            vmem_limit_bytes=limit),
    )(flats, starts, counts_p, table)
    # Empty bags: count 0 -> never touched after the zero-init -> zeros (PyTorch).
    return pooled[:n_bags]


# ---------------------------------------------------------------------------
# Layer
# ---------------------------------------------------------------------------
class EmbeddingLayer:
    """JAX/Pallas port of the PyTorch EmbeddingLayer (forward only)."""

    def __init__(self, sparse_shapes: dict, embedding_dim: int = 16, seed: int = 0):
        self.embedding_dim = embedding_dim
        self.params = {}
        self.kinds = {}
        key = jax.random.PRNGKey(seed)
        multi = set(FEAT_NAMES["multi_sparse_feats"])
        for feat, vocab in sparse_shapes.items():
            key, sub = jax.random.split(key)
            # nn.Embedding / nn.EmbeddingBag default init: N(0, 1)
            self.params[feat] = jax.random.normal(
                sub, (vocab, embedding_dim), dtype=jnp.float32)
            self.kinds[feat] = "bag" if feat in multi else "embedding"
        for feat in FEAT_NAMES["dense_feats"]:
            key, sub = jax.random.split(key)
            # nn.Linear(1, E, bias=False): weight shape (E, 1), U(-1, 1)
            self.params[feat] = jax.random.uniform(
                sub, (embedding_dim, 1), minval=-1.0, maxval=1.0,
                dtype=jnp.float32)
            self.kinds[feat] = "dense"

    def __call__(self, samples: dict) -> dict:
        emb_dim = self.embedding_dim
        single, multi, dense = [], [], []
        for feat, kind in self.kinds.items():
            if feat not in samples:
                continue
            if kind == "embedding":
                single.append(feat)
            elif kind == "bag":
                multi.append(feat)
            else:
                dense.append(feat)

        embedded = {}
        if single:
            indices = jnp.stack(
                [jnp.clip(jnp.asarray(samples[f]).reshape(-1).astype(jnp.int32),
                          0, self.params[f].shape[0] - 1)
                 for f in single], axis=0)                        # (S, B)
            tables = tuple(self.params[f] for f in single)
            if dense:
                dense_vals = jnp.stack(
                    [jnp.asarray(samples[f]).reshape(-1).astype(jnp.float32)
                     for f in dense], axis=1)                     # (B, D)
                dense_weights = jnp.stack(
                    [self.params[f].reshape(-1) for f in dense], axis=0)  # (D, E)
            else:
                dense_vals = dense_weights = None
            slab = _fused_single_row(indices, tables, dense_vals, dense_weights)
            for i, f in enumerate(single):
                embedded[f] = slab[:, i * emb_dim:(i + 1) * emb_dim]
            for j, f in enumerate(dense):
                off = (len(single) + j) * emb_dim
                embedded[f] = slab[:, off:off + emb_dim]
        elif dense:
            # No sparse feature to fuse with: a lone (B,1)x(1,E) broadcast multiply
            # as a standalone Pallas call is pure launch overhead; leave it to XLA.
            for f in dense:
                val = jnp.asarray(samples[f]).reshape(-1, 1).astype(jnp.float32)
                embedded[f] = val * self.params[f].reshape(1, -1)

        for f in multi:
            flats, offsets = samples[f]
            embedded[f] = _embedding_bag_mean(flats, offsets, self.params[f])
        return embedded


# ---------------------------------------------------------------------------
# Demo / smoke test
# ---------------------------------------------------------------------------
if __name__ == "__main__":
    B = 8
    EMB = 16
    sparse_shapes = {"user_id": 32, "item_id": 64, "tags": 48}

    layer = EmbeddingLayer(sparse_shapes, embedding_dim=EMB, seed=0)

    key = jax.random.PRNGKey(0)
    k1, k2, k3, k4 = jax.random.split(key, 4)

    user_id = jax.random.randint(k1, (B,), 0, 32, dtype=jnp.int32)
    item_id = jax.random.randint(k2, (B,), 0, 64, dtype=jnp.int32)

    # multi-sparse "tags": 3 indices per sample -> flats (B*3,), offsets (B,)
    flats = jax.random.randint(k3, (B * 3,), 0, 48, dtype=jnp.int32)
    offsets = jnp.arange(B, dtype=jnp.int32) * 3

    price = jax.random.uniform(k4, (B, 1), dtype=jnp.float32)

    samples = {
        "user_id": user_id,
        "item_id": item_id,
        "tags": (flats, offsets),
        "price": price,
    }

    out = layer(samples)
    out = jax.block_until_ready(out)

    # sanity checks against pure-JAX references
    ref_user = layer.params["user_id"][user_id]
    ref_item = layer.params["item_id"][item_id]
    ref_tags = layer.params["tags"][flats].reshape(B, 3, EMB).mean(axis=1)
    ref_price = price @ layer.params["price"].T

    assert out["user_id"].shape == (B, EMB)
    assert out["item_id"].shape == (B, EMB)
    assert out["tags"].shape == (B, EMB)
    assert out["price"].shape == (B, EMB)
    assert jnp.allclose(out["user_id"], ref_user, atol=1e-5)
    assert jnp.allclose(out["item_id"], ref_item, atol=1e-5)
    assert jnp.allclose(out["tags"], ref_tags, atol=1e-5)
    assert jnp.allclose(out["price"], ref_price, atol=1e-5)

    print("KERNEL_OK")
</pallas_src>

<mosaic_0001>
module attributes {stable_mosaic.version = 11 : i64} {
  func.func @kernel(%arg0: i32, %arg1: memref<2x8xi32, #tpu.memory_space<smem>>, %arg2: memref<32x16xf32, #tpu.memory_space<vmem>>, %arg3: memref<64x16xf32, #tpu.memory_space<vmem>>, %arg4: memref<8x1xf32, #tpu.memory_space<vmem>>, %arg5: memref<1x16xf32, #tpu.memory_space<vmem>>, %arg6: memref<8x128xf32, #tpu.memory_space<vmem>>) attributes {dimension_semantics = [#tpu.dimension_semantics<parallel>], iteration_bounds = array<i64: 1>, scalar_prefetch = 1 : i64, scratch_operands = 0 : i64, tpu.core_type = #tpu.core_type<tc>, window_params = [{pipeline_mode = #tpu.pipeline_mode<synchronous>, transform_indices = @transform_0, window_bounds = array<i64: 32, 16>}, {pipeline_mode = #tpu.pipeline_mode<synchronous>, transform_indices = @transform_1, window_bounds = array<i64: 64, 16>}, {transform_indices = @transform_2, window_bounds = array<i64: 8, 1>}, {pipeline_mode = #tpu.pipeline_mode<synchronous>, transform_indices = @transform_3, window_bounds = array<i64: 1, 16>}, {transform_indices = @transform_4, window_bounds = array<i64: 8, 128>}]} {
    %c8_i32 = arith.constant 8 : i32
    %0 = arith.muli %arg0, %c8_i32 : i32
    %cst = arith.constant 0.000000e+00 : f32
    %1 = vector.broadcast %cst : f32 to vector<8x128xf32>
    %c0 = arith.constant 0 : index
    %c0_0 = arith.constant 0 : index
    %2 = vector.load %arg6[%c0, %c0_0] : memref<8x128xf32, #tpu.memory_space<vmem>>, vector<8x128xf32>
    tpu.vector_store %arg6[%c0, %c0_0], %1 {strides = array<i32>} : memref<8x128xf32, #tpu.memory_space<vmem>>, vector<8x128xf32>,
    %c0_i32 = arith.constant 0 : i32
    %c8_i32_1 = arith.constant 8 : i32
    %3 = arith.addi %c0_i32, %c8_i32_1 : i32
    %c1_i32 = arith.constant 1 : i32
    scf.for %arg7 = %c0_i32 to %3 step %c1_i32  : i32 {
      %c1_i32_8 = arith.constant 1 : i32
      %10 = arith.muli %arg7, %c1_i32_8 : i32
      %c0_i32_9 = arith.constant 0 : i32
      %11 = arith.addi %c0_i32_9, %10 : i32
      %12 = arith.addi %0, %11 : i32
      %c0_10 = arith.constant 0 : index
      %13 = arith.index_cast %12 : i32 to index
      %14 = memref.load %arg1[%c0_10, %13] : memref<2x8xi32, #tpu.memory_space<smem>>
      %15 = arith.index_cast %14 : i32 to index
      %c0_11 = arith.constant 0 : index
      %16 = vector.load %arg2[%15, %c0_11] : memref<32x16xf32, #tpu.memory_space<vmem>>, vector<1x16xf32>
      %17 = vector.shape_cast %16 : vector<1x16xf32> to vector<16xf32>
      %18 = vector.shape_cast %17 : vector<16xf32> to vector<1x16xf32>
      %19 = arith.index_cast %11 : i32 to index
      %c0_12 = arith.constant 0 : index
      %20 = vector.load %arg6[%19, %c0_12] : memref<8x128xf32, #tpu.memory_space<vmem>>, vector<1x16xf32>
      tpu.vector_store %arg6[%19, %c0_12], %18 {strides = array<i32>} : memref<8x128xf32, #tpu.memory_space<vmem>>, vector<1x16xf32>,
      %21 = arith.addi %0, %11 : i32
      %c1 = arith.constant 1 : index
      %22 = arith.index_cast %21 : i32 to index
      %23 = memref.load %arg1[%c1, %22] : memref<2x8xi32, #tpu.memory_space<smem>>
      %24 = arith.index_cast %23 : i32 to index
      %c0_13 = arith.constant 0 : index
      %25 = vector.load %arg3[%24, %c0_13] : memref<64x16xf32, #tpu.memory_space<vmem>>, vector<1x16xf32>
      %26 = vector.shape_cast %25 : vector<1x16xf32> to vector<16xf32>
      %27 = vector.shape_cast %26 : vector<16xf32> to vector<1x16xf32>
      %28 = arith.index_cast %11 : i32 to index
      %c16 = arith.constant 16 : index
      %29 = vector.load %arg6[%28, %c16] : memref<8x128xf32, #tpu.memory_space<vmem>>, vector<1x16xf32>
      tpu.vector_store %arg6[%28, %c16], %27 {strides = array<i32>} : memref<8x128xf32, #tpu.memory_space<vmem>>, vector<1x16xf32>,
    }
    %c8_i32_2 = arith.constant 8 : i32
    %c0_3 = arith.constant 0 : index
    %c0_4 = arith.constant 0 : index
    %4 = vector.load %arg4[%c0_3, %c0_4] : memref<8x1xf32, #tpu.memory_space<vmem>>, vector<8x1xf32>
    %c0_5 = arith.constant 0 : index
    %c0_6 = arith.constant 0 : index
    %5 = vector.load %arg5[%c0_5, %c0_6] : memref<1x16xf32, #tpu.memory_space<vmem>>, vector<1x16xf32>
    %6 = vector.broadcast %4 : vector<8x1xf32> to vector<8x16xf32>
    %7 = vector.broadcast %5 : vector<1x16xf32> to vector<8x16xf32>
    %8 = arith.mulf %6, %7 : vector<8x16xf32>
    %c0_7 = arith.constant 0 : index
    %c32 = arith.constant 32 : index
    %9 = vector.load %arg6[%c0_7, %c32] : memref<8x128xf32, #tpu.memory_space<vmem>>, vector<8x16xf32>
    tpu.vector_store %arg6[%c0_7, %c32], %8 {strides = array<i32>} : memref<8x128xf32, #tpu.memory_space<vmem>>, vector<8x16xf32>,
    return
  }
  func.func @transform_0(%arg0: i32, %arg1: memref<2x8xi32, #tpu.memory_space<smem>>) -> (i32, i32) {
    %c0_i32 = arith.constant 0 : i32
    %c0_i32_0 = arith.constant 0 : i32
    %c0_i32_1 = arith.constant 0 : i32
    return %c0_i32, %c0_i32_0 : i32, i32
  }
  func.func @transform_1(%arg0: i32, %arg1: memref<2x8xi32, #tpu.memory_space<smem>>) -> (i32, i32) {
    %c0_i32 = arith.constant 0 : i32
    %c0_i32_0 = arith.constant 0 : i32
    %c0_i32_1 = arith.constant 0 : i32
    return %c0_i32, %c0_i32_0 : i32, i32
  }
  func.func @transform_2(%arg0: i32, %arg1: memref<2x8xi32, #tpu.memory_space<smem>>) -> (i32, i32) {
    %c0_i32 = arith.constant 0 : i32
    %c0_i32_0 = arith.constant 0 : i32
    return %arg0, %c0_i32 : i32, i32
  }
  func.func @transform_3(%arg0: i32, %arg1: memref<2x8xi32, #tpu.memory_space<smem>>) -> (i32, i32) {
    %c0_i32 = arith.constant 0 : i32
    %c0_i32_0 = arith.constant 0 : i32
    %c0_i32_1 = arith.constant 0 : i32
    return %c0_i32, %c0_i32_0 : i32, i32
  }
  func.func @transform_4(%arg0: i32, %arg1: memref<2x8xi32, #tpu.memory_space<smem>>) -> (i32, i32) {
    %c0_i32 = arith.constant 0 : i32
    %c0_i32_0 = arith.constant 0 : i32
    return %arg0, %c0_i32 : i32, i32
  }
}

</mosaic_0001>

<llo_original>
// kernel: _fused_single_row.1
$region0: #{_fused_single_row.1}
  #allocation0 [shape = 'u32[]', space=smem, size = 0x4, offset = 0x4, fixed_abs, tag = 'smem constant byte address 0x4 - core index']
  #allocation1 [shape = 'u32[72,128]{1,0:T(1,128)}', space=vmem, size = 0x9000, scoped, tag = 'internal scratch']
  #allocation2 [shape = 's32[1]{0}', space=sflag, size = 0x4, scoped, tag = 'scoped memory for _fused_single_row.1']
  #allocation3 [shape = 'u8[1024]{0}', space=smem, size = 0x400, scoped, tag = 'prefetched SMEM operand 0']
  %s0 = inlined_call_operand.vmem [shape: s32[2,8], index: 0, kind: input, shape index: {}]
  %s1 = inlined_call_operand.vmem [shape: f32[32,16], index: 1, kind: input, shape index: {}]
  %s2 = inlined_call_operand.vmem [shape: f32[64,16], index: 2, kind: input, shape index: {}]
  %s3 = inlined_call_operand.vmem [shape: f32[8,1], index: 3, kind: input, shape index: {}]
  %s4 = inlined_call_operand.vmem [shape: f32[1,16], index: 4, kind: input, shape index: {}]
  %s5 = inlined_call_operand.hbm [shape: f32[8,128], index: 5, kind: output, shape index: {}]
  %s6 = sld [smem:[#allocation0]]
  $region33: #{_fused_single_row.1} parent=0
    _
  %s8 = ssub.s32 1, %s6
  %s9 = scalar_select 0, %s8, %s6
  %s11 = sshll.u32 %s0, 4
  %s12 = int_to_ptr.vmem [resolvable:$true] %s11
  %14 = dma.vmem_to_smem %s12, 32, [#allocation3], [#allocation2]
  %16 = dma.done [#allocation2], 32
  %17 = sfence
  $region1: #{_fused_single_row.1} parent=0
    #allocation4 [shape = 'u8[4096]{0}', space=vmem, size = 0x1000, scoped, tag = 'output window, operand 0, single buffered']
    #allocation5 [shape = 's32[1]{0}', space=sflag, size = 0x4, scoped, tag = 'scoped memory for _fused_single_row.1']
    %18 = vsyncpa [#allocation5], 0
    // Predicated region
    $region2: #{_fused_single_row.1} parent=1 // pred_check
      _
    $region3: #{_fused_single_row.1} parent=1 // pred_check_branch
      %20 = sbr.rel (0) target = $region5
    $region4: #{_fused_single_row.1} parent=1 // pred_region
      _
    $region5: #{_fused_single_row.1} parent=1 // pred_fallthru
      _
    // Predicated region
    $region6: #{_fused_single_row.1} parent=1 // pred_check
      _
    $region7: #{_fused_single_row.1} parent=1 // pred_check_branch
      %22 = sbr.rel (0) target = $region9
    $region8: #{_fused_single_row.1} parent=1 // pred_region
      _
    $region9: #{_fused_single_row.1} parent=1 // pred_fallthru
      _
    // Predicated region
    $region10: #{_fused_single_row.1} parent=1 // pred_check
      _
    $region11: #{_fused_single_row.1} parent=1 // pred_check_branch
      %24 = sbr.rel (0) target = $region13
    $region12: #{_fused_single_row.1} parent=1 // pred_region
      _
    $region13: #{_fused_single_row.1} parent=1 // pred_fallthru
      _
    // Predicated region
    $region14: #{_fused_single_row.1} parent=1 // pred_check
      _
    $region15: #{_fused_single_row.1} parent=1 // pred_check_branch
      %26 = sbr.rel (0) target = $region17
    $region16: #{_fused_single_row.1} parent=1 // pred_region
      _
    $region17: #{_fused_single_row.1} parent=1 // pred_fallthru
      _
    %s27 = smul.u32 0, 8
    %28 = vst [vmem:[#allocation4] sm:$0xff] 0.0
    loop: start=0, step=1, limit=8
    $region18: #{_fused_single_row.1} parent=1 // loop_pre_header
      _
    $region19: #{_fused_single_row.1} parent=1 // loop_header
      %s30 = sphi 0, %s34
      %p31 = scmp.ge.s32.totalorder %s30, 8
    $region20: #{_fused_single_row.1} parent=1 // loop_header_branch
      %33 = sbr.rel (%p31) target = $region24
    $region21: #{_fused_single_row.1} parent=1 // loop_body
      %s35 = sadd.s32 %s27, %s30
      %s36 = sld [smem:[#allocation3 + %s35]]
      %s37 = scalar_lea.vmem %s1, %s36
      %v38 = vld [vmem:[%s37] sm:$0x1]
      %s39 = scalar_lea.vmem [#allocation4], %s30
      %vm40 = vcmask 122880
      %41 = vst.msk [vmem:[%s39] sm:$0x1] %vm40, %v38
      %s42 = sshra.s32 %s35, 7
      %s43 = sand.u32 %s35, 127
      %s44 = sadd.s32 %s42, 1
      %s45 = smul.u32 %s44, 128
      %s46 = sshra.s32 %s35, 7
      %s47 = sand.u32 %s35, 127
      %s48 = sadd.s32 %s45, %s47
      %s49 = sld [smem:[#allocation3 + %s48]]
      %s50 = scalar_lea.vmem %s2, %s49
      %v51 = vld [vmem:[%s50] sm:$0x1]
      %53 = vrot.lane.b32.xlu0 %v51, 16
      %v54 = vpop.permute.xlu0 %53
      %vm56 = vcmask 254080
      %57 = vst.msk [vmem:[%s39] sm:$0x1] %vm56, %v54
    $region22: #{_fused_single_row.1} parent=1 // loop_footer
      %s34 = sadd.s32 1, %s30
    $region23: #{_fused_single_row.1} parent=1 // loop_footer_branch
      %29 = sbr.rel target = $region19
    $region24: #{_fused_single_row.1} parent=1 // loop_exit
      _
    %v58 = vld [vmem:[%s3] sm:$0xff]
    %v59 = vld [vmem:[%s4] sm:$0x1]
    %61 = vset.pattern.permute.xlu0 0
    %62 = vperm.xlu0 %61, %v58
    %v63 = vpop.permute.xlu0 %62
    %v66 = vperm.slane %v59, 0
    %v68 = vmul.f32 %v63, %v66
    %70 = vrot.lane.b32.xlu0 %v68, 32
    %v71 = vpop.permute.xlu0 %70
    %vm73 = vcmask 392448
    %74 = vst.msk [vmem:[#allocation4] sm:$0xff] %vm73, %v71
    // Predicated region
    $region25: #{_fused_single_row.1} parent=1 // pred_check
      _
    $region26: #{_fused_single_row.1} parent=1 // pred_check_branch
      %76 = sbr.rel (0) target = $region28
    $region27: #{_fused_single_row.1} parent=1 // pred_region
      %78 = vsyncadd [#allocation5], 0
      %s80 = sshll.u32 [#allocation4], 4
      %s81 = int_to_ptr.vmem [resolvable:$true] %s80
      %s82 = sshll.u32 %s5, 4
      %s83 = int_to_ptr.hbm [resolvable:$true] %s82
      %85 = dma.vmem_to_hbm [thread:$0]  %s81, 128, %s83, [#allocation5]
    $region28: #{_fused_single_row.1} parent=1 // pred_fallthru
      _
    // Predicated region
    $region29: #{_fused_single_row.1} parent=1 // pred_check
      _
    $region30: #{_fused_single_row.1} parent=1 // pred_check_branch
      %87 = sbr.rel (0) target = $region32
    $region31: #{_fused_single_row.1} parent=1 // pred_region
      %89 = dma.done [#allocation5], 128
    $region32: #{_fused_single_row.1} parent=1 // pred_fallthru
      _
    %90 = vsyncpa [#allocation5], 1

</llo_original>
